<compile_context>
chip_gen: v7x
topology: tpu7x:2x2x1
jax: 0.10.0
libtpu: 0.0.40
codegen_flags: <defaults>
</compile_context>

<pallas_src>
import math
import functools

import jax
import jax.numpy as jnp
from jax import lax
from jax.experimental import pallas as pl
from jax.experimental.pallas import tpu as pltpu


_EPS2 = 1e-24  # (F.normalize eps = 1e-12) ** 2


def _cosine_kernel(x_ref, w_ref, inv_x_ref, inv_w_ref, o_ref, *, cast_bf16):
    """One (TB, TN) tile of cosine = (x @ W.T) * (1/|x|) * (1/|w|).

    Pure matmul + scale: row norms are precomputed in the wrapper and the ArcFace
    margin is applied as an O(B) post-pass, so nothing competes with the MXU here.
    """
    x = x_ref[...]                     # (TB, D), native dtype
    w = w_ref[...]                     # (TN, D), native dtype
    if cast_bf16:
        # Optional perf knob for f32 inputs on v6e/v7x: bf16 MXU rate, f32 accumulation.
        x = x.astype(jnp.bfloat16)
        w = w.astype(jnp.bfloat16)
    raw = lax.dot_general(
        x, w,
        dimension_numbers=(((1,), (1,)), ((), ())),
        preferred_element_type=jnp.float32,
    )                                  # (TB, TN) f32
    o_ref[...] = (raw * inv_x_ref[...] * inv_w_ref[...]).astype(o_ref.dtype)


def _round_up(v, m):
    return ((v + m - 1) // m) * m


def _vmem_limit_bytes():
    """Scoped-VMEM limit derived from the chip, leaving headroom for compiler scratch:
    ~48 MiB on v7x (64 MiB physical per TensorCore), ~100 MiB on v5e/v6e (128 MiB)."""
    try:
        cap = int(pltpu.get_tpu_info().vmem_capacity_bytes)
    except Exception:
        cap = 64 * 1024 * 1024      # conservative default (v7x per-TC)
    return max(32 * 1024 * 1024, min(cap - 16 * 1024 * 1024, 100 * 1024 * 1024))


def _select_tiles(B, N, D, itemsize, b_tile, n_tile, fit_budget):
    # Minimum sublane pack for the input dtype (avoid sub-32-bit packing relayouts).
    sub = {4: 8, 2: 16, 1: 32}.get(itemsize, 8)

    # N tile: lane-aligned, streamed over the grid.
    TN = min(_round_up(N, 128), max(128, n_tile))

    # B tile: keep the whole (padded) batch resident when it is modest, so every W
    # tile is DMA'd from HBM exactly once (W reuse is the main bandwidth lever).
    B_sub = _round_up(B, sub)
    if b_tile is None:
        if B_sub * D * itemsize <= 8 * 1024 * 1024:
            TB = B_sub
        else:
            TB = min(512, B_sub)    # 256-aligned for the v6e/v7x 2x256x256 MXU
    else:
        TB = min(_round_up(b_tile, sub), B_sub)

    # Shrink to the VMEM budget (inputs/outputs are double-buffered by the pipeline).
    def fits(tb, tn):
        est = (2 * tb * D + 2 * tn * D) * itemsize \
              + 2 * tb * tn * itemsize + 2 * (tb + tn) * 4
        return est <= fit_budget

    while not fits(TB, TN) and TN > 128:
        TN = max(128, _round_up(TN // 2, 128))
    while not fits(TB, TN) and TB > sub:
        TB = max(sub, _round_up(TB // 2, sub))
    # TODO(synk): for extreme in_features that still overflow VMEM at minimum tiles,
    # add a D ("arbitrary") grid axis with an f32 accumulator scratch instead.

    # v7x megacore: expose >= 2 tiles on at least one "parallel" axis.
    nb = -(-B // TB)
    nn = -(-N // TN)
    if nb == 1 and nn == 1:
        if N > 128:
            TN = _round_up(-(-N // 2), 128)
        elif B > sub:
            TB = max(sub, _round_up(-(-B // 2), sub))
    return TB, TN


def arc_linear(x, weight, label=None, m=0.5, *, n_tile=512, b_tile=None,
               use_bf16_matmul=False):
    """JAX/Pallas equivalent of ArcLinear.forward(input, label)."""
    B, D = x.shape
    N, D2 = weight.shape
    assert D == D2, "in_features mismatch"

    out_dtype = x.dtype
    itemsize = jnp.dtype(x.dtype).itemsize
    cast_bf16 = bool(use_bf16_matmul) and x.dtype == jnp.float32

    vmem_limit = _vmem_limit_bytes()
    TB, TN = _select_tiles(B, N, D, itemsize, b_tile, n_tile,
                           fit_budget=int(vmem_limit * 0.8))

    # Zero-pad to tile multiples (deterministic edge tiles; padded rows/cols yield a
    # finite cosine of 0 and are sliced off below).
    B_pad = _round_up(B, TB)
    N_pad = _round_up(N, TN)
    x_p = x if B_pad == B else jnp.pad(x, ((0, B_pad - B), (0, 0)))
    w_p = weight if N_pad == N else jnp.pad(weight, ((0, N_pad - N), (0, 0)))

    # Hoisted row inverse-norms: computed once here instead of per grid step in-kernel.
    x_f = x_p.astype(jnp.float32)
    w_f = w_p.astype(jnp.float32)
    inv_x = lax.rsqrt(jnp.maximum(jnp.sum(x_f * x_f, axis=1, keepdims=True), _EPS2))      # (B_pad, 1)
    inv_w = lax.rsqrt(jnp.maximum(jnp.sum(w_f * w_f, axis=1), _EPS2)).reshape(1, N_pad)   # (1, N_pad)

    nb = B_pad // TB
    nn = N_pad // TN

    kernel = functools.partial(_cosine_kernel, cast_bf16=cast_bf16)

    cost = pl.CostEstimate(
        flops=2 * B_pad * N_pad * D + 2 * B_pad * N_pad,
        transcendentals=0,
        bytes_accessed=(nb * N_pad * D + B_pad * D) * itemsize
                       + B_pad * N_pad * jnp.dtype(out_dtype).itemsize
                       + (B_pad + nb * N_pad) * 4,
    )

    cosine = pl.pallas_call(
        kernel,
        out_shape=jax.ShapeDtypeStruct((B_pad, N_pad), out_dtype),
        grid_spec=pltpu.PrefetchScalarGridSpec(
            num_scalar_prefetch=0,
            grid=(nb, nn),
            in_specs=[
                pl.BlockSpec((TB, D), lambda i, j: (i, 0)),   # x: resident across j
                pl.BlockSpec((TN, D), lambda i, j: (j, 0)),   # W: streamed over N tiles
                pl.BlockSpec((TB, 1), lambda i, j: (i, 0)),   # 1/|x| (f32, column layout)
                pl.BlockSpec((1, TN), lambda i, j: (0, j)),   # 1/|w| (f32, row layout)
            ],
            out_specs=pl.BlockSpec((TB, TN), lambda i, j: (i, j)),
        ),
        compiler_params=pltpu.CompilerParams(
            dimension_semantics=("parallel", "parallel"),
            vmem_limit_bytes=vmem_limit,
        ),
        cost_estimate=cost,
    )(x_p, w_p, inv_x, inv_w)

    if B_pad != B or N_pad != N:
        cosine = cosine[:B, :N]

    if label is None or m == 0:
        return cosine

    # ArcFace margin as an O(B) post-pass: gather the label column, compute psi on B
    # values, scatter back (only B elements touched).
    cos_m = math.cos(m)
    sin_m = math.sin(m)
    rows = jnp.arange(B, dtype=jnp.int32)
    lbl = label.reshape(-1).astype(jnp.int32)
    cos_t = cosine[rows, lbl].astype(jnp.float32)                     # (B,)
    sine_t = jnp.sqrt(jnp.maximum(1.0 - cos_t * cos_t, 0.0))
    psi_t = cos_t * cos_m - sine_t * sin_m
    psi_t = jnp.where(cos_t > -cos_m, psi_t, -psi_t - 2.0)
    return cosine.at[rows, lbl].set(psi_t.astype(cosine.dtype))


def _reference(x, weight, label, m=0.5):
    """Pure-JAX reference mirroring the PyTorch forward (accurate f32 matmul)."""
    eps = 1e-12
    xn = x / jnp.maximum(jnp.linalg.norm(x, axis=1, keepdims=True), eps)
    wn = weight / jnp.maximum(jnp.linalg.norm(weight, axis=1, keepdims=True), eps)
    cosine = jnp.dot(xn, wn.T, precision=jax.lax.Precision.HIGHEST)
    if label is None or m == 0:
        return cosine
    sine = jnp.sqrt(jnp.maximum(1.0 - cosine ** 2, 0.0))
    psi = cosine * math.cos(m) - sine * math.sin(m)
    psi = jnp.where(cosine > -math.cos(m), psi, -psi - 2.0)
    one_hot = jax.nn.one_hot(label, cosine.shape[1], dtype=cosine.dtype)
    return one_hot * psi + (1.0 - one_hot) * cosine


if __name__ == "__main__":
    key = jax.random.PRNGKey(0)
    k_x, k_w, k_l, k_x2, k_w2, k_l2 = jax.random.split(key, 6)

    m = 0.5

    # Case 1: tile-friendly shapes (two N tiles of 128 after megacore split).
    B, in_features, out_features = 8, 64, 256
    x = jax.random.normal(k_x, (B, in_features), dtype=jnp.float32)
    bound = math.sqrt(6.0 / (in_features + out_features))       # xavier_uniform_-style
    weight = jax.random.uniform(k_w, (out_features, in_features), dtype=jnp.float32,
                                minval=-bound, maxval=bound)
    label = jax.random.randint(k_l, (B,), 0, out_features, dtype=jnp.int32)

    out = jax.block_until_ready(arc_linear(x, weight, label, m=m))
    cos_only = jax.block_until_ready(arc_linear(x, weight, None, m=m))
    ref = _reference(x, weight, label, m=m)
    ref_cos = _reference(x, weight, None, m=m)
    assert jnp.allclose(out, ref, atol=5e-3), "margin path mismatch"
    assert jnp.allclose(cos_only, ref_cos, atol=5e-3), "cosine path mismatch"

    # Case 2: B / N / D not multiples of the tile sizes (exercises wrapper padding).
    B2, in2, out2 = 10, 48, 200
    x2 = jax.random.normal(k_x2, (B2, in2), dtype=jnp.float32)
    bound2 = math.sqrt(6.0 / (in2 + out2))
    weight2 = jax.random.uniform(k_w2, (out2, in2), dtype=jnp.float32,
                                 minval=-bound2, maxval=bound2)
    label2 = jax.random.randint(k_l2, (B2,), 0, out2, dtype=jnp.int32)
    out2_v = jax.block_until_ready(arc_linear(x2, weight2, label2, m=m))
    ref2 = _reference(x2, weight2, label2, m=m)
    assert jnp.allclose(out2_v, ref2, atol=5e-3), "ragged-shape path mismatch"

    # Optional bf16-MXU path (perf knob for v6e/v7x); looser numeric tolerance.
    out_bf16 = jax.block_until_ready(
        arc_linear(x, weight, label, m=m, use_bf16_matmul=True))
    assert jnp.allclose(out_bf16, ref, atol=5e-2), "bf16-matmul path mismatch"

    print("KERNEL_OK")
</pallas_src>

<mosaic_0001>
module attributes {stable_mosaic.version = 11 : i64} {
  func.func @_cosine_kernel(%arg0: i32, %arg1: i32, %arg2: memref<8x64xf32, #tpu.memory_space<vmem>>, %arg3: memref<128x64xf32, #tpu.memory_space<vmem>>, %arg4: memref<8x1xf32, #tpu.memory_space<vmem>>, %arg5: memref<1x128xf32, #tpu.memory_space<vmem>>, %arg6: memref<8x128xf32, #tpu.memory_space<vmem>>) attributes {dimension_semantics = [#tpu.dimension_semantics<parallel>, #tpu.dimension_semantics<parallel>], iteration_bounds = array<i64: 1, 2>, scalar_prefetch = 0 : i64, scratch_operands = 0 : i64, tpu.core_type = #tpu.core_type<tc>, window_params = [{transform_indices = @transform_0, window_bounds = array<i64: 8, 64>}, {transform_indices = @transform_1, window_bounds = array<i64: 128, 64>}, {transform_indices = @transform_2, window_bounds = array<i64: 8, 1>}, {transform_indices = @transform_3, window_bounds = array<i64: 1, 128>}, {transform_indices = @transform_4, window_bounds = array<i64: 8, 128>}]} {
    %c0 = arith.constant 0 : index
    %c0_0 = arith.constant 0 : index
    %0 = vector.load %arg2[%c0, %c0_0] : memref<8x64xf32, #tpu.memory_space<vmem>>, vector<8x64xf32>
    %c0_1 = arith.constant 0 : index
    %c0_2 = arith.constant 0 : index
    %1 = vector.load %arg3[%c0_1, %c0_2] : memref<128x64xf32, #tpu.memory_space<vmem>>, vector<128x64xf32>
    %cst = arith.constant dense<0.000000e+00> : vector<8x128xf32>
    %2 = tpu.matmul %0, %1, %cst {dimension_numbers = #tpu.dot_dimension_numbers<[1], [1], [0], [0], [0, 0, 1, 0], [], []>} : vector<8x64xf32>, vector<128x64xf32>, vector<8x128xf32> -> vector<8x128xf32>
    %c0_3 = arith.constant 0 : index
    %c0_4 = arith.constant 0 : index
    %3 = vector.load %arg4[%c0_3, %c0_4] : memref<8x1xf32, #tpu.memory_space<vmem>>, vector<8x1xf32>
    %4 = vector.broadcast %3 : vector<8x1xf32> to vector<8x128xf32>
    %5 = arith.mulf %2, %4 : vector<8x128xf32>
    %c0_5 = arith.constant 0 : index
    %c0_6 = arith.constant 0 : index
    %6 = vector.load %arg5[%c0_5, %c0_6] : memref<1x128xf32, #tpu.memory_space<vmem>>, vector<1x128xf32>
    %7 = vector.broadcast %6 : vector<1x128xf32> to vector<8x128xf32>
    %8 = arith.mulf %5, %7 : vector<8x128xf32>
    %c0_7 = arith.constant 0 : index
    %c0_8 = arith.constant 0 : index
    %9 = vector.load %arg6[%c0_7, %c0_8] : memref<8x128xf32, #tpu.memory_space<vmem>>, vector<8x128xf32>
    tpu.vector_store %arg6[%c0_7, %c0_8], %8 {strides = array<i32>} : memref<8x128xf32, #tpu.memory_space<vmem>>, vector<8x128xf32>,
    return
  }
  func.func @transform_0(%arg0: i32, %arg1: i32) -> (i32, i32) {
    %c0_i32 = arith.constant 0 : i32
    %c0_i32_0 = arith.constant 0 : i32
    return %arg0, %c0_i32 : i32, i32
  }
  func.func @transform_1(%arg0: i32, %arg1: i32) -> (i32, i32) {
    %c0_i32 = arith.constant 0 : i32
    %c0_i32_0 = arith.constant 0 : i32
    return %arg1, %c0_i32 : i32, i32
  }
  func.func @transform_2(%arg0: i32, %arg1: i32) -> (i32, i32) {
    %c0_i32 = arith.constant 0 : i32
    %c0_i32_0 = arith.constant 0 : i32
    return %arg0, %c0_i32 : i32, i32
  }
  func.func @transform_3(%arg0: i32, %arg1: i32) -> (i32, i32) {
    %c0_i32 = arith.constant 0 : i32
    %c0_i32_0 = arith.constant 0 : i32
    return %c0_i32, %arg1 : i32, i32
  }
  func.func @transform_4(%arg0: i32, %arg1: i32) -> (i32, i32) {
    %c0_i32 = arith.constant 0 : i32
    return %arg0, %arg1 : i32, i32
  }
}

</mosaic_0001>

<llo_original>
// kernel: tpu_custom_call.1
$region0: #{tpu_custom_call.1}
  #allocation0 [shape = 'u32[]', space=smem, size = 0x4, offset = 0x4, fixed_abs, tag = 'smem constant byte address 0x4 - core index']
  #allocation1 [shape = 'u32[144,128]{1,0:T(1,128)}', space=vmem, size = 0x12000, scoped, tag = 'internal scratch']
  %s0 = inlined_call_operand.vmem [shape: f32[8,64], index: 0, kind: input, shape index: {}]
  %s1 = inlined_call_operand.vmem [shape: f32[256,64], index: 1, kind: input, shape index: {}]
  %s2 = inlined_call_operand.vmem [shape: f32[8,1], index: 2, kind: input, shape index: {}]
  %s3 = inlined_call_operand.vmem [shape: f32[1,256], index: 3, kind: input, shape index: {}]
  %s4 = inlined_call_operand.hbm [shape: f32[8,256], index: 4, kind: output, shape index: {}]
  %s5 = sld [smem:[#allocation0]]
  $region49: #{tpu_custom_call.1} parent=0
    _
  %s7 = ssub.s32 1, %s5
  %s8 = scalar_select 0, %s7, %s5
  $region1: #{tpu_custom_call.1} parent=0
    #allocation2 [shape = 'u8[8192]{0}', space=vmem, size = 0x2000, scoped, tag = 'output window, operand 0']
    #allocation3 [shape = 's32[2]{0}', space=sflag, size = 0x8, scoped, tag = 'scoped memory for tpu_custom_call.1']
    %9 = vsyncpa [#allocation3], 0
    %s10 = scalar_lea.sflag [#allocation3], 1
    %11 = vsyncpa %s10, 0
    loop: start=0, step=1, limit=4
    $region2: #{tpu_custom_call.1} parent=1 // loop_pre_header
      _
    $region3: #{tpu_custom_call.1} parent=1 // loop_header
      %s13 = sphi 0, %s17
      %p14 = scmp.ge.s32.totalorder %s13, 4
      %s20 = sphi 0, %s32
      %s21 = sphi 0, %s28
      %s22 = sphi 0, %s20
      %s23 = sphi 0, %s21
      %s24 = sphi 0, %s22
      %s25 = sphi 0, %s23
      %s35 = sphi 0, %s37
      %s38 = sphi 0, %s35
      %s39 = sphi 0, %s38
      %s55 = sphi 0, %s39
      %s61 = sphi 0, %s63
      %s64 = sphi 0, %s61
      %s65 = sphi 0, %s64
      %s81 = sphi 0, %s65
      %s87 = sphi 0, %s89
      %s90 = sphi 0, %s87
      %s91 = sphi 0, %s90
      %s107 = sphi 0, %s91
      %s113 = sphi 0, %s115
      %s116 = sphi 0, %s113
      %s117 = sphi 0, %s116
      %s133 = sphi 0, %s117
      %s141 = sphi 0, %s143
      %s144 = sphi 0, %s141
      %s145 = sphi 0, %s144
      %s161 = sphi 0, %s145
    $region4: #{tpu_custom_call.1} parent=1 // loop_header_branch
      %16 = sbr.rel (%p14) target = $region8
    $region5: #{tpu_custom_call.1} parent=1 // loop_body
      %s18 = ssub.s32 %s13, 1
      %s19 = ssub.s32 %s13, 2
      %s26 = sadd.s32 1, %s21
      %p27 = scmp.ge.s32.totalorder %s26, 2
      %s28 = scalar_select %p27, 0, %s26
      %s29 = sadd.s32 1, %s20
      %s30 = scalar_select %p27, %s29, %s20
      %p31 = scmp.ge.s32.totalorder %s30, 1
      %s32 = scalar_select %p31, 0, %s30
      %s33 = ssub.s32 %s20, %s32
      %p34 = scmp.eq.s32.totalorder %s33, 0
      %s36 = sadd.s32 %s35, 1
      %s37 = scalar_select %p34, %s35, %s36
      %p40 = pneg %p34
      %p41 = scmp.eq.s32.totalorder %s13, 1
      %p42 = por %p40, %p41
      %p43 = scmp.ne.s32.totalorder %s35, %s38
      %p44 = scmp.eq.s32.totalorder %s13, 0
      %p45 = por %p43, %p44
      %p46 = scmp.ne.s32.totalorder %s35, %s38
      %p47 = scmp.eq.s32.totalorder %s18, 1
      %p48 = por %p46, %p47
      %p49 = scmp.ne.s32.totalorder %s38, %s39
      %p50 = scmp.eq.s32.totalorder %s18, 0
      %p51 = por %p49, %p50
      %p52 = scmp.ne.s32.totalorder %s38, %s39
      %p53 = scmp.eq.s32.totalorder %s19, 1
      %p54 = por %p52, %p53
      %p56 = scmp.ne.s32.totalorder %s39, %s55
      %p57 = scmp.eq.s32.totalorder %s19, 0
      %p58 = por %p56, %p57
      %s59 = ssub.s32 %s21, %s28
      %p60 = scmp.eq.s32.totalorder %s59, 0
      %s62 = sadd.s32 %s61, 1
      %s63 = scalar_select %p60, %s61, %s62
      %p66 = pneg %p60
      %p67 = scmp.eq.s32.totalorder %s13, 1
      %p68 = por %p66, %p67
      %p69 = scmp.ne.s32.totalorder %s61, %s64
      %p70 = scmp.eq.s32.totalorder %s13, 0
      %p71 = por %p69, %p70
      %p72 = scmp.ne.s32.totalorder %s61, %s64
      %p73 = scmp.eq.s32.totalorder %s18, 1
      %p74 = por %p72, %p73
      %p75 = scmp.ne.s32.totalorder %s64, %s65
      %p76 = scmp.eq.s32.totalorder %s18, 0
      %p77 = por %p75, %p76
      %p78 = scmp.ne.s32.totalorder %s64, %s65
      %p79 = scmp.eq.s32.totalorder %s19, 1
      %p80 = por %p78, %p79
      %p82 = scmp.ne.s32.totalorder %s65, %s81
      %p83 = scmp.eq.s32.totalorder %s19, 0
      %p84 = por %p82, %p83
      %s85 = ssub.s32 %s20, %s32
      %p86 = scmp.eq.s32.totalorder %s85, 0
      %s88 = sadd.s32 %s87, 1
      %s89 = scalar_select %p86, %s87, %s88
      %p92 = pneg %p86
      %p93 = scmp.eq.s32.totalorder %s13, 1
      %p94 = por %p92, %p93
      %p95 = scmp.ne.s32.totalorder %s87, %s90
      %p96 = scmp.eq.s32.totalorder %s13, 0
      %p97 = por %p95, %p96
      %p98 = scmp.ne.s32.totalorder %s87, %s90
      %p99 = scmp.eq.s32.totalorder %s18, 1
      %p100 = por %p98, %p99
      %p101 = scmp.ne.s32.totalorder %s90, %s91
      %p102 = scmp.eq.s32.totalorder %s18, 0
      %p103 = por %p101, %p102
      %p104 = scmp.ne.s32.totalorder %s90, %s91
      %p105 = scmp.eq.s32.totalorder %s19, 1
      %p106 = por %p104, %p105
      %p108 = scmp.ne.s32.totalorder %s91, %s107
      %p109 = scmp.eq.s32.totalorder %s19, 0
      %p110 = por %p108, %p109
      %s111 = ssub.s32 %s21, %s28
      %p112 = scmp.eq.s32.totalorder %s111, 0
      %s114 = sadd.s32 %s113, 1
      %s115 = scalar_select %p112, %s113, %s114
      %p118 = pneg %p112
      %p119 = scmp.eq.s32.totalorder %s13, 1
      %p120 = por %p118, %p119
      %p121 = scmp.ne.s32.totalorder %s113, %s116
      %p122 = scmp.eq.s32.totalorder %s13, 0
      %p123 = por %p121, %p122
      %p124 = scmp.ne.s32.totalorder %s113, %s116
      %p125 = scmp.eq.s32.totalorder %s18, 1
      %p126 = por %p124, %p125
      %p127 = scmp.ne.s32.totalorder %s116, %s117
      %p128 = scmp.eq.s32.totalorder %s18, 0
      %p129 = por %p127, %p128
      %p130 = scmp.ne.s32.totalorder %s116, %s117
      %p131 = scmp.eq.s32.totalorder %s19, 1
      %p132 = por %p130, %p131
      %p134 = scmp.ne.s32.totalorder %s117, %s133
      %p135 = scmp.eq.s32.totalorder %s19, 0
      %p136 = por %p134, %p135
      %s137 = ssub.s32 %s20, %s32
      %s138 = ssub.s32 %s21, %s28
      %s139 = sor.u32 %s137, %s138
      %p140 = scmp.eq.s32.totalorder %s139, 0
      %s142 = sadd.s32 %s141, 1
      %s143 = scalar_select %p140, %s141, %s142
      %p146 = pneg %p140
      %p147 = scmp.eq.s32.totalorder %s13, 1
      %p148 = por %p146, %p147
      %p149 = scmp.ne.s32.totalorder %s141, %s144
      %p150 = scmp.eq.s32.totalorder %s13, 0
      %p151 = por %p149, %p150
      %p152 = scmp.ne.s32.totalorder %s141, %s144
      %p153 = scmp.eq.s32.totalorder %s18, 1
      %p154 = por %p152, %p153
      %p155 = scmp.ne.s32.totalorder %s144, %s145
      %p156 = scmp.eq.s32.totalorder %s18, 0
      %p157 = por %p155, %p156
      %p158 = scmp.ne.s32.totalorder %s144, %s145
      %p159 = scmp.eq.s32.totalorder %s19, 1
      %p160 = por %p158, %p159
      %p162 = scmp.ne.s32.totalorder %s145, %s161
      %p163 = scmp.eq.s32.totalorder %s19, 0
      %p164 = por %p162, %p163
      %p165 = scmp.le.s32.totalorder 1, %s13
      %p166 = scmp.lt.s32.totalorder %s13, 3
      %p167 = pnand %p165, %p166
      %p168 = pneg %p167
      // Predicated region
      $region9: #{tpu_custom_call.1} parent=5 // pred_check
        _
      $region10: #{tpu_custom_call.1} parent=5 // pred_check_branch
        %170 = sbr.rel (%p167) target = $region12
      $region11: #{tpu_custom_call.1} parent=5 // pred_region
        %s171 = ssub.s32 %s13, 1
        // Predicated region
        $region13: #{tpu_custom_call.1} parent=11 // pred_check
          %p172 = pneg %p51
        $region14: #{tpu_custom_call.1} parent=11 // pred_check_branch
          %174 = sbr.rel (%p172) target = $region16
        $region15: #{tpu_custom_call.1} parent=11 // pred_region
          %p175 = scmp.lt.s32.totalorder %s22, 0
          %s176 = scalar_select %p175, %s22, 0
          %s177 = smul.addr %s176, 8
          %s178 = scalar_lea.vmem %s0, %s177
        $region16: #{tpu_custom_call.1} parent=11 // pred_fallthru
          _
        // Predicated region
        $region17: #{tpu_custom_call.1} parent=11 // pred_check
          %p179 = pneg %p103
        $region18: #{tpu_custom_call.1} parent=11 // pred_check_branch
          %181 = sbr.rel (%p179) target = $region20
        $region19: #{tpu_custom_call.1} parent=11 // pred_region
          %p182 = scmp.lt.s32.totalorder %s22, 0
          %s183 = scalar_select %p182, %s22, 0
          %s184 = smul.addr %s183, 8
          %s185 = scalar_lea.vmem %s2, %s184
        $region20: #{tpu_custom_call.1} parent=11 // pred_fallthru
          _
      $region12: #{tpu_custom_call.1} parent=5 // pred_fallthru
        _
      %p186 = scmp.lt.s32.totalorder %s13, 2
      // Predicated region
      $region21: #{tpu_custom_call.1} parent=5 // pred_check
        %p187 = pneg %p186
      $region22: #{tpu_custom_call.1} parent=5 // pred_check_branch
        %189 = sbr.rel (%p187) target = $region24
      $region23: #{tpu_custom_call.1} parent=5 // pred_region
        // Predicated region
        $region25: #{tpu_custom_call.1} parent=23 // pred_check
          %p190 = pneg %p71
        $region26: #{tpu_custom_call.1} parent=23 // pred_check_branch
          %192 = sbr.rel (%p190) target = $region28
        $region27: #{tpu_custom_call.1} parent=23 // pred_region
          %s193 = smul.u32 16, %s21
          %p194 = scmp.lt.s32.totalorder %s193, 31
          %s195 = scalar_select %p194, %s193, 31
          %s196 = smul.addr %s195, 8
          %s197 = scalar_lea.vmem %s1, %s196
          %s198 = smul.u32 16, %s21
        $region28: #{tpu_custom_call.1} parent=23 // pred_fallthru
          _
        // Predicated region
        $region29: #{tpu_custom_call.1} parent=23 // pred_check
          %p199 = pneg %p123
        $region30: #{tpu_custom_call.1} parent=23 // pred_check_branch
          %201 = sbr.rel (%p199) target = $region32
        $region31: #{tpu_custom_call.1} parent=23 // pred_region
          %p202 = scmp.lt.s32.totalorder %s21, 1
          %s203 = scalar_select %p202, %s21, 1
          %s204 = scalar_lea.vmem %s3, %s203
        $region32: #{tpu_custom_call.1} parent=23 // pred_fallthru
          _
      $region24: #{tpu_custom_call.1} parent=5 // pred_fallthru
        _
      %p205 = scmp.le.s32.totalorder 1, %s13
      %p206 = scmp.lt.s32.totalorder %s13, 3
      %p207 = pnand %p205, %p206
      %p208 = pneg %p207
      // Predicated region
      $region33: #{tpu_custom_call.1} parent=5 // pred_check
        _
      $region34: #{tpu_custom_call.1} parent=5 // pred_check_branch
        %210 = sbr.rel (%p207) target = $region36
      $region35: #{tpu_custom_call.1} parent=5 // pred_region
        %s211 = ssub.s32 %s13, 1
        %p212 = scmp.lt.s32.totalorder %s22, 0
        %s213 = scalar_select %p212, %s22, 0
        %s214 = smul.addr %s213, 8
        %s215 = scalar_lea.vmem %s0, %s214
        %p216 = pneg %p51
        %p217 = pneg %p48
        %s218 = smul.u32 16, %s23
        %p219 = scmp.lt.s32.totalorder %s218, 31
        %s220 = scalar_select %p219, %s218, 31
        %s221 = smul.addr %s220, 8
        %s222 = scalar_lea.vmem %s1, %s221
        %p223 = pneg %p77
        %p224 = pneg %p74
        %p225 = scmp.lt.s32.totalorder %s22, 0
        %s226 = scalar_select %p225, %s22, 0
        %s227 = smul.addr %s226, 8
        %s228 = scalar_lea.vmem %s2, %s227
        %p229 = pneg %p103
        %p230 = pneg %p100
        %p231 = scmp.lt.s32.totalorder %s23, 1
        %s232 = scalar_select %p231, %s23, 1
        %s233 = scalar_lea.vmem %s3, %s232
        %p234 = pneg %p129
        %p235 = pneg %p126
        %p236 = pneg %p157
        %p237 = pneg %p154
        %s238 = sand.u32 %s144, 1
        %s239 = scalar_lea.sflag [#allocation3], %s238
        %s240 = sand.u32 %s144, 1
        %s241 = smul.addr %s240, 8
        %s242 = scalar_lea.vmem [#allocation2], %s241
        %p243 = scmp.lt.s32.totalorder %s22, 0
        %s244 = scalar_select %p243, %s22, 0
        %s245 = smul.addr %s244, 8
        %s246 = scalar_lea.vmem %s0, %s245
        %s247 = smul.u32 16, %s23
        %p248 = scmp.lt.s32.totalorder %s247, 31
        %s249 = scalar_select %p248, %s247, 31
        %s250 = smul.addr %s249, 8
        %s251 = scalar_lea.vmem %s1, %s250
        %s252 = smul.u32 16, %s23
        %p253 = scmp.lt.s32.totalorder %s22, 0
        %s254 = scalar_select %p253, %s22, 0
        %s255 = smul.addr %s254, 8
        %s256 = scalar_lea.vmem %s2, %s255
        %p257 = scmp.lt.s32.totalorder %s23, 1
        %s258 = scalar_select %p257, %s23, 1
        %s259 = scalar_lea.vmem %s3, %s258
        %v260 = vld [vmem:[%s246] sm:$0xff]
        %v261 = vld [vmem:[%s251] sm:$0xff]
        %v262 = vld [vmem:[%s251 + $0x8] sm:$0xff]
        %v263 = vld [vmem:[%s251 + $0x10] sm:$0xff]
        %v264 = vld [vmem:[%s251 + $0x18] sm:$0xff]
        %v265 = vld [vmem:[%s251 + $0x20] sm:$0xff]
        %v266 = vld [vmem:[%s251 + $0x28] sm:$0xff]
        %v267 = vld [vmem:[%s251 + $0x30] sm:$0xff]
        %v268 = vld [vmem:[%s251 + $0x38] sm:$0xff]
        %v269 = vld [vmem:[%s251 + $0x40] sm:$0xff]
        %v270 = vld [vmem:[%s251 + $0x48] sm:$0xff]
        %v271 = vld [vmem:[%s251 + $0x50] sm:$0xff]
        %v272 = vld [vmem:[%s251 + $0x58] sm:$0xff]
        %v273 = vld [vmem:[%s251 + $0x60] sm:$0xff]
        %v274 = vld [vmem:[%s251 + $0x68] sm:$0xff]
        %v275 = vld [vmem:[%s251 + $0x70] sm:$0xff]
        %v276 = vld [vmem:[%s251 + $0x78] sm:$0xff]
        %vm277 = vcmask 523264
        %v279 = vsel %vm277, %v260, 0
        %v282 = vsel %vm277, %v261, 0
        %v285 = vsel %vm277, %v262, 0
        %v288 = vsel %vm277, %v263, 0
        %v291 = vsel %vm277, %v264, 0
        %v294 = vsel %vm277, %v265, 0
        %v297 = vsel %vm277, %v266, 0
        %v300 = vsel %vm277, %v267, 0
        %v303 = vsel %vm277, %v268, 0
        %v306 = vsel %vm277, %v269, 0
        %v309 = vsel %vm277, %v270, 0
        %v312 = vsel %vm277, %v271, 0
        %v315 = vsel %vm277, %v272, 0
        %v318 = vsel %vm277, %v273, 0
        %v321 = vsel %vm277, %v274, 0
        %v324 = vsel %vm277, %v275, 0
        %v327 = vsel %vm277, %v276, 0
        %329 = vmatprep.subr.mxu0 0.0
        %330 = vmatpush1.xpose.msra.mxu0 %v282
        %331 = vmatprep.subr.mxu0 0.0
        %332 = vmatpush1.xpose.msra.mxu0 %v285
        %333 = vmatprep.subr.mxu0 0.0
        %334 = vmatpush1.xpose.msra.mxu0 %v288
        %335 = vmatprep.subr.mxu0 0.0
        %336 = vmatpush1.xpose.msra.mxu0 %v291
        %337 = vmatprep.subr.mxu0 0.0
        %338 = vmatpush1.xpose.msra.mxu0 %v294
        %339 = vmatprep.subr.mxu0 0.0
        %340 = vmatpush1.xpose.msra.mxu0 %v297
        %341 = vmatprep.subr.mxu0 0.0
        %342 = vmatpush1.xpose.msra.mxu0 %v300
        %343 = vmatprep.subr.mxu0 0.0
        %344 = vmatpush1.xpose.msra.mxu0 %v303
        %345 = vmatprep.subr.mxu0 0.0
        %346 = vmatpush1.xpose.msra.mxu0 %v306
        %347 = vmatprep.subr.mxu0 0.0
        %348 = vmatpush1.xpose.msra.mxu0 %v309
        %349 = vmatprep.subr.mxu0 0.0
        %350 = vmatpush1.xpose.msra.mxu0 %v312
        %351 = vmatprep.subr.mxu0 0.0
        %352 = vmatpush1.xpose.msra.mxu0 %v315
        %353 = vmatprep.subr.mxu0 0.0
        %354 = vmatpush1.xpose.msra.mxu0 %v318
        %355 = vmatprep.subr.mxu0 0.0
        %356 = vmatpush1.xpose.msra.mxu0 %v321
        %357 = vmatprep.subr.mxu0 0.0
        %358 = vmatpush1.xpose.msra.mxu0 %v324
        %359 = vmatprep.subr.mxu0 0.0
        %360 = vmatpush1.xpose.msra.mxu0 %v327
        %361 = vmatprep.subr.mxu0 0.0
        %362 = vmatpush1.xpose.msra.mxu0 0.0
        %363 = vmatprep.subr.mxu0 0.0
        %364 = vmatpush1.xpose.msra.mxu0 0.0
        %365 = vmatprep.subr.mxu0 0.0
        %366 = vmatpush1.xpose.msra.mxu0 0.0
        %367 = vmatprep.subr.mxu0 0.0
        %368 = vmatpush1.xpose.msra.mxu0 0.0
        %369 = vmatprep.subr.mxu0 0.0
        %370 = vmatpush1.xpose.msra.mxu0 0.0
        %371 = vmatprep.subr.mxu0 0.0
        %372 = vmatpush1.xpose.msra.mxu0 0.0
        %373 = vmatprep.subr.mxu0 0.0
        %374 = vmatpush1.xpose.msra.mxu0 0.0
        %375 = vmatprep.subr.mxu0 0.0
        %376 = vmatpush1.xpose.msra.mxu0 0.0
        %377 = vmatprep.subr.mxu0 0.0
        %378 = vmatpush1.xpose.msra.mxu0 0.0
        %379 = vmatprep.subr.mxu0 0.0
        %380 = vmatpush1.xpose.msra.mxu0 0.0
        %381 = vmatprep.subr.mxu0 0.0
        %382 = vmatpush1.xpose.msra.mxu0 0.0
        %383 = vmatprep.subr.mxu0 0.0
        %384 = vmatpush1.xpose.msra.mxu0 0.0
        %385 = vmatprep.subr.mxu0 0.0
        %386 = vmatpush1.xpose.msra.mxu0 0.0
        %387 = vmatprep.subr.mxu0 0.0
        %388 = vmatpush1.xpose.msra.mxu0 0.0
        %389 = vmatprep.subr.mxu0 0.0
        %390 = vmatpush1.xpose.msra.mxu0 0.0
        %391 = vmatprep.subr.mxu0 0.0
        %392 = vmatpush1.xpose.msra.mxu0 0.0
        %393 = vmatprep.mubr.f32.mxu0 0.0
        %394 = vmatmul.mubr.f32.gmra.mrb[0].mxu0 %v279
        %v395 = vpop.f32.mrb[0].mxu0
        %v396 = vadd.f32 0.0, %v395
        %v397 = vpop.f32.mrb[0].mxu0
        %398 = vdwg.mxu0
        %v399 = vld [vmem:[%s256] sm:$0xff]
        %401 = vset.pattern.permute.xlu0 0
        %402 = vperm.xlu0 %401, %v399
        %v403 = vpop.permute.xlu0 %402
        %v405 = vmul.f32 %v396, %v403
        %v406 = vld [vmem:[%s259] sm:$0x1]
        %v408 = vlaneseq
        %v409 = vshrl.u32 %v408, 7
        %v410 = vsub.s32 0, %v409
        %v411 = vrot.slane %v406, %v410
        %v413 = vmul.f32 %v405, %v411
        %414 = vst [vmem:[%s242] sm:$0xff] %v413
        %s415 = sand.u32 %s144, 1
        %s416 = scalar_lea.sflag [#allocation3], %s415
        %s417 = sand.u32 %s144, 1
        %s418 = smul.addr %s417, 8
        %s419 = scalar_lea.vmem [#allocation2], %s418
        // Predicated region
        $region37: #{tpu_custom_call.1} parent=35 // pred_check
          %p420 = pneg %p154
        $region38: #{tpu_custom_call.1} parent=35 // pred_check_branch
          %422 = sbr.rel (%p420) target = $region40
        $region39: #{tpu_custom_call.1} parent=35 // pred_region
          %s424 = ssub.s32 128, 128
          %425 = vsyncadd %s416, %s424
          %s426 = smul.addr %s22, 2
          %s427 = sadd.s32 %s23, %s426
          %s428 = smul.addr %s427, 128
          %s429 = scalar_lea.hbm %s4, %s428
          %s431 = sshll.u32 %s419, 4
          %s432 = int_to_ptr.vmem [resolvable:$true] %s431
          %434 = dma.vmem_to_hbm [thread:$0]  %s432, 128, %s429, %s416
        $region40: #{tpu_custom_call.1} parent=35 // pred_fallthru
          _
      $region36: #{tpu_custom_call.1} parent=5 // pred_fallthru
        _
      %p435 = scmp.le.s32.totalorder 2, %s13
      // Predicated region
      $region41: #{tpu_custom_call.1} parent=5 // pred_check
        %p436 = pneg %p435
      $region42: #{tpu_custom_call.1} parent=5 // pred_check_branch
        %438 = sbr.rel (%p436) target = $region44
      $region43: #{tpu_custom_call.1} parent=5 // pred_region
        %s439 = ssub.s32 %s13, 2
        // Predicated region
        $region45: #{tpu_custom_call.1} parent=43 // pred_check
          %p440 = pneg %p160
        $region46: #{tpu_custom_call.1} parent=43 // pred_check_branch
          %442 = sbr.rel (%p440) target = $region48
        $region47: #{tpu_custom_call.1} parent=43 // pred_region
          %s443 = sand.u32 %s145, 1
          %s444 = scalar_lea.sflag [#allocation3], %s443
          %s445 = sand.u32 %s145, 1
          %s446 = smul.addr %s445, 8
          %s447 = scalar_lea.vmem [#allocation2], %s446
          %448 = dma.done %s444, 128
        $region48: #{tpu_custom_call.1} parent=43 // pred_fallthru
          _
      $region44: #{tpu_custom_call.1} parent=5 // pred_fallthru
        _
    $region6: #{tpu_custom_call.1} parent=1 // loop_footer
      %s17 = sadd.s32 1, %s13
    $region7: #{tpu_custom_call.1} parent=1 // loop_footer_branch
      %12 = sbr.rel target = $region3
    $region8: #{tpu_custom_call.1} parent=1 // loop_exit
      _
    %449 = vsyncpa [#allocation3], 1
    %s450 = scalar_lea.sflag [#allocation3], 1
    %451 = vsyncpa %s450, 1

</llo_original>
